<compile_context>
chip_gen: v7x
topology: tpu7x:2x2x1
jax: 0.10.0
libtpu: 0.0.40
codegen_flags: <defaults>
</compile_context>

<pallas_src>
import functools

import jax
import jax.numpy as jnp
from jax.experimental import pallas as pl
from jax.experimental.pallas import tpu as pltpu

# head output sizes, in forward-return order
HEAD_DIMS = [7, 10, 28, 58, 28, 27, 7, 34, 70, 7, 6, 7, 20]
HEAD_NAMES = [
    "dst_act", "dst_request_slots", "dst_type", "dst_price",
    "dst_customer_review", "dst_brand", "dst_size", "dst_pattern",
    "dst_color", "dst_sleeve_length", "dst_available_sizes",
    "dst_materials", "dst_customer_rating",
]
T_TOTAL = sum(HEAD_DIMS)          # 309
T_PAD = 384                       # round_up(309, 128); keep at 384 (ideal for v5e)


def _round_up(x, m):
    return ((x + m - 1) // m) * m


def _cdiv(a, b):
    return -(-a // b)


def _dst_fused_kernel(x_ref, w_ref, b_ref, out_ref):
    # One MXU matmul per batch tile: logits = x @ W_comb + b_comb (f32 acc).
    acc = jnp.dot(x_ref[...], w_ref[...], preferred_element_type=jnp.float32)
    out_ref[...] = (acc + b_ref[...].astype(jnp.float32)).astype(out_ref.dtype)


def _resident_spec(block_shape):
    """Constant-index (VMEM-resident) operand; single-buffered when supported."""
    try:
        return pl.BlockSpec(block_shape, lambda i: (0, 0),
                            pipeline_mode=pl.Buffered(1))
    except (TypeError, AttributeError):   # older JAX without pipeline_mode
        return pl.BlockSpec(block_shape, lambda i: (0, 0))


def dst_head_forward(x, w_comb, b_comb, *, block_b=512, out_dtype=jnp.float32):
    """Fused DSTHead forward.

    x:      [B, H] activations (f32 or bf16; cast to w_comb.dtype).
    w_comb: [H_pad, 384] fused weight, H_pad = round_up(H, 128).
    b_comb: [1, 384] fused bias (kept f32).
    Returns the 13 per-head logit tensors in DSTHead.forward order.
    """
    B, H = x.shape
    H_pad, T_pad = w_comb.shape
    assert H_pad == _round_up(H, 128) and T_pad == T_PAD, (w_comb.shape, H)

    compute_dtype = w_comb.dtype
    if x.dtype != compute_dtype:
        # bf16 activations halve the dominant HBM stream; ideally the producer
        # already emits bf16 so this cast never materializes.
        x = x.astype(compute_dtype)

    # Batch tile: bounded padding (< row_mult rows per step), >=2 grid steps
    # when B permits so v7x can shard the "parallel" axis across both TCs.
    row_mult = 16 if jnp.dtype(compute_dtype).itemsize == 2 else 8
    block_b = max(row_mult, _round_up(block_b, row_mult))
    n_steps = _cdiv(B, block_b)
    if n_steps == 1 and B >= 2 * row_mult:
        n_steps = 2
    TB = _round_up(_cdiv(B, n_steps), row_mult)
    B_pad = n_steps * TB

    # Pad only if needed; skipped entirely when H % 128 == 0 and B % TB == 0,
    # so no extra HBM round trip of x in the production case.
    if (B_pad, H_pad) != (B, H):
        # TODO(synk): truly ragged production batches could use a masked-store
        # last tile instead of this padded copy of x.
        x = jnp.pad(x, ((0, B_pad - B), (0, H_pad - H)))

    x_it = jnp.dtype(compute_dtype).itemsize
    w_it = jnp.dtype(w_comb.dtype).itemsize
    b_it = jnp.dtype(b_comb.dtype).itemsize
    o_it = jnp.dtype(out_dtype).itemsize

    cost = pl.CostEstimate(
        flops=2 * B_pad * H_pad * T_pad,
        transcendentals=0,
        bytes_accessed=(B_pad * H_pad * x_it + H_pad * T_pad * w_it
                        + T_pad * b_it + B_pad * T_pad * o_it))

    # Precise VMEM need: weight counted double-buffered (conservative even if
    # the Buffered(1) hint is honored), double-buffered x/out tiles, bias,
    # +25% headroom; capped at 56 MiB (< v7x's 64 MiB physical VMEM).
    vmem_needed = (2 * H_pad * T_pad * w_it
                   + 2 * 8 * T_pad * b_it
                   + 2 * TB * H_pad * x_it
                   + 2 * TB * T_pad * o_it)
    vmem_limit = int(min(max(int(vmem_needed * 1.25), 16 * 2 ** 20),
                         56 * 2 ** 20))

    out = pl.pallas_call(
        _dst_fused_kernel,
        out_shape=jax.ShapeDtypeStruct((B_pad, T_pad), out_dtype),
        grid_spec=pltpu.PrefetchScalarGridSpec(
            num_scalar_prefetch=0,
            grid=(n_steps,),
            in_specs=[
                # x tile: indexed by the batch-grid position (pipelined).
                pl.BlockSpec((TB, H_pad), lambda i: (i, 0)),
                # Fused weight / bias: fetched once, VMEM-resident.
                _resident_spec((H_pad, T_pad)),
                _resident_spec((1, T_pad)),
            ],
            out_specs=pl.BlockSpec((TB, T_pad), lambda i: (i, 0)),
        ),
        compiler_params=pltpu.CompilerParams(
            dimension_semantics=("parallel",),   # megacore split on v7x
            vmem_limit_bytes=vmem_limit,
        ),
        cost_estimate=cost,
    )(x, w_comb, b_comb)

    # Slice the lane-dense slab back into the 13 per-head tensors (same jit,
    # so XLA fuses these with downstream consumers).
    out = out[:B]
    results = []
    off = 0
    for d in HEAD_DIMS:
        results.append(out[:, off:off + d])
        off += d
    return tuple(results)


def init_params(hidden_dim, key):
    """Per-layer params mimicking nn.Linear init, stored in x @ W form."""
    keys = jax.random.split(key, 2 + 2 * len(HEAD_DIMS))
    bound = 1.0 / float(jnp.sqrt(hidden_dim))
    params = {
        "w_agg": jax.random.uniform(keys[0], (hidden_dim, hidden_dim),
                                    jnp.float32, -bound, bound),
        "b_agg": jax.random.uniform(keys[1], (hidden_dim,),
                                    jnp.float32, -bound, bound),
        "w_heads": [],
        "b_heads": [],
    }
    for i, d in enumerate(HEAD_DIMS):
        params["w_heads"].append(
            jax.random.uniform(keys[2 + 2 * i], (hidden_dim, d),
                               jnp.float32, -bound, bound))
        params["b_heads"].append(
            jax.random.uniform(keys[3 + 2 * i], (d,),
                               jnp.float32, -bound, bound))
    return params


def prepare_fused_params(params, *, dtype=jnp.float32):
    """Host-side algebraic fusion of aggregator + 13 heads.

    Pads H to a multiple of 128 (contraction dim) and packs/pads the head
    outputs to a lane-dense 384 slab.  For production use dtype=jnp.bfloat16;
    the bias stays f32 and the kernel accumulates in f32 regardless.
    """
    hidden_dim = params["w_agg"].shape[0]
    H_pad = _round_up(hidden_dim, 128)

    w_heads = jnp.concatenate(params["w_heads"], axis=1)          # [H, 309]
    b_heads = jnp.concatenate(params["b_heads"], axis=0)          # [309]

    w_comb = params["w_agg"] @ w_heads                            # [H, 309]
    b_comb = params["b_agg"] @ w_heads + b_heads                  # [309]

    w_comb = jnp.pad(w_comb, ((0, H_pad - hidden_dim), (0, T_PAD - T_TOTAL)))
    b_comb = jnp.pad(b_comb, (0, T_PAD - T_TOTAL))[None, :]       # [1, 384]
    return w_comb.astype(dtype), b_comb.astype(jnp.float32)


def reference_forward(x, params):
    """Pure-JAX reference matching the original two-stage PyTorch forward."""
    agg = x @ params["w_agg"] + params["b_agg"]
    return tuple(agg @ w + b
                 for w, b in zip(params["w_heads"], params["b_heads"]))


if __name__ == "__main__":
    hidden_dim = 32
    batch = 8

    key = jax.random.PRNGKey(0)
    k_x, k_p = jax.random.split(key)
    x = jax.random.normal(k_x, (batch, hidden_dim), jnp.float32)
    params = init_params(hidden_dim, k_p)
    refs = reference_forward(x, params)

    fwd = jax.jit(dst_head_forward, static_argnames=("block_b", "out_dtype"))

    # 1) f32 weights / f32 activations: tight check vs the two-stage reference.
    w32, b32 = prepare_fused_params(params, dtype=jnp.float32)
    outs = jax.block_until_ready(fwd(x, w32, b32))
    for name, d, o, r in zip(HEAD_NAMES, HEAD_DIMS, outs, refs):
        assert o.shape == (batch, d), (name, o.shape)
        assert jnp.allclose(o, r, atol=1e-4, rtol=1e-4), name

    # 2) Production path: bf16 weights + bf16 activations, bf16 logits.
    wbf, bbf = prepare_fused_params(params, dtype=jnp.bfloat16)
    outs_bf = jax.block_until_ready(
        fwd(x.astype(jnp.bfloat16), wbf, bbf, out_dtype=jnp.bfloat16))
    for name, d, o, r in zip(HEAD_NAMES, HEAD_DIMS, outs_bf, refs):
        assert o.shape == (batch, d), (name, o.shape)
        assert jnp.allclose(o.astype(jnp.float32), r, atol=1e-1, rtol=1e-1), name

    # 3) Multi-step grid + ragged batch (exercises padding + parallel axis).
    x_big = jax.random.normal(k_x, (40, hidden_dim), jnp.float32)
    refs_big = reference_forward(x_big, params)
    outs_big = jax.block_until_ready(fwd(x_big, w32, b32, block_b=16))
    for d, o, r in zip(HEAD_DIMS, outs_big, refs_big):
        assert o.shape == (40, d)
        assert jnp.allclose(o, r, atol=1e-4, rtol=1e-4)

    print("KERNEL_OK")
</pallas_src>

<mosaic_0001>
module attributes {stable_mosaic.version = 11 : i64} {
  func.func @_dst_fused_kernel(%arg0: i32, %arg1: memref<8x128xf32, #tpu.memory_space<vmem>>, %arg2: memref<128x384xf32, #tpu.memory_space<vmem>>, %arg3: memref<1x384xf32, #tpu.memory_space<vmem>>, %arg4: memref<8x384xf32, #tpu.memory_space<vmem>>) attributes {dimension_semantics = [#tpu.dimension_semantics<parallel>], iteration_bounds = array<i64: 1>, scalar_prefetch = 0 : i64, scratch_operands = 0 : i64, tpu.core_type = #tpu.core_type<tc>, window_params = [{transform_indices = @transform_0, window_bounds = array<i64: 8, 128>}, {pipeline_mode = #tpu.pipeline_mode<synchronous>, transform_indices = @transform_1, window_bounds = array<i64: 128, 384>}, {pipeline_mode = #tpu.pipeline_mode<synchronous>, transform_indices = @transform_2, window_bounds = array<i64: 1, 384>}, {transform_indices = @transform_3, window_bounds = array<i64: 8, 384>}]} {
    %c0 = arith.constant 0 : index
    %c0_0 = arith.constant 0 : index
    %0 = vector.load %arg1[%c0, %c0_0] : memref<8x128xf32, #tpu.memory_space<vmem>>, vector<8x128xf32>
    %c0_1 = arith.constant 0 : index
    %c0_2 = arith.constant 0 : index
    %1 = vector.load %arg2[%c0_1, %c0_2] : memref<128x384xf32, #tpu.memory_space<vmem>>, vector<128x384xf32>
    %cst = arith.constant dense<0.000000e+00> : vector<8x384xf32>
    %2 = tpu.matmul %0, %1, %cst {dimension_numbers = #tpu.dot_dimension_numbers<[1], [0], [0], [1], [0, 0, 1, 1], [], []>} : vector<8x128xf32>, vector<128x384xf32>, vector<8x384xf32> -> vector<8x384xf32>
    %c0_3 = arith.constant 0 : index
    %c0_4 = arith.constant 0 : index
    %3 = vector.load %arg3[%c0_3, %c0_4] : memref<1x384xf32, #tpu.memory_space<vmem>>, vector<1x384xf32>
    %4 = vector.broadcast %3 : vector<1x384xf32> to vector<8x384xf32>
    %5 = arith.addf %2, %4 : vector<8x384xf32>
    %c0_5 = arith.constant 0 : index
    %c0_6 = arith.constant 0 : index
    %6 = vector.load %arg4[%c0_5, %c0_6] : memref<8x384xf32, #tpu.memory_space<vmem>>, vector<8x384xf32>
    tpu.vector_store %arg4[%c0_5, %c0_6], %5 {strides = array<i32>} : memref<8x384xf32, #tpu.memory_space<vmem>>, vector<8x384xf32>,
    return
  }
  func.func @transform_0(%arg0: i32) -> (i32, i32) {
    %c0_i32 = arith.constant 0 : i32
    %c0_i32_0 = arith.constant 0 : i32
    return %arg0, %c0_i32 : i32, i32
  }
  func.func @transform_1(%arg0: i32) -> (i32, i32) {
    %c0_i32 = arith.constant 0 : i32
    %c0_i32_0 = arith.constant 0 : i32
    %c0_i32_1 = arith.constant 0 : i32
    return %c0_i32, %c0_i32_0 : i32, i32
  }
  func.func @transform_2(%arg0: i32) -> (i32, i32) {
    %c0_i32 = arith.constant 0 : i32
    %c0_i32_0 = arith.constant 0 : i32
    %c0_i32_1 = arith.constant 0 : i32
    return %c0_i32, %c0_i32_0 : i32, i32
  }
  func.func @transform_3(%arg0: i32) -> (i32, i32) {
    %c0_i32 = arith.constant 0 : i32
    %c0_i32_0 = arith.constant 0 : i32
    return %arg0, %c0_i32 : i32, i32
  }
}

</mosaic_0001>

<llo_original>
// kernel: dst_head_forward.1
$region0: #{dst_head_forward.1}
  #allocation0 [shape = 'u32[]', space=smem, size = 0x4, offset = 0x4, fixed_abs, tag = 'smem constant byte address 0x4 - core index']
  #allocation1 [shape = 'u32[144,128]{1,0:T(1,128)}', space=vmem, size = 0x12000, scoped, tag = 'internal scratch']
  %s0 = inlined_call_operand.vmem [shape: f32[8,128], index: 0, kind: input, shape index: {}]
  %s1 = inlined_call_operand.hbm [shape: f32[128,384], index: 1, kind: input, shape index: {}]
  %s2 = inlined_call_operand.vmem [shape: f32[1,384], index: 2, kind: input, shape index: {}]
  %s3 = inlined_call_operand.vmem [shape: f32[8,384], index: 3, kind: output, shape index: {}]
  %s4 = sld [smem:[#allocation0]]
  $region26: #{dst_head_forward.1} parent=0
    _
  %s6 = ssub.s32 1, %s4
  %s7 = scalar_select 0, %s6, %s4
  $region1: #{dst_head_forward.1} parent=0
    #allocation2 [shape = 'u8[196608]{0}', space=vmem, size = 0x30000, scoped, tag = 'input window, operand 1, single buffered']
    #allocation3 [shape = 's32[1]{0}', space=sflag, size = 0x4, scoped, tag = 'scoped memory for dst_head_forward.1']
    %8 = vsyncpa [#allocation3], 0
    // Predicated region
    $region2: #{dst_head_forward.1} parent=1 // pred_check
      _
    $region3: #{dst_head_forward.1} parent=1 // pred_check_branch
      %10 = sbr.rel (0) target = $region5
    $region4: #{dst_head_forward.1} parent=1 // pred_region
      _
    $region5: #{dst_head_forward.1} parent=1 // pred_fallthru
      _
    // Predicated region
    $region6: #{dst_head_forward.1} parent=1 // pred_check
      _
    $region7: #{dst_head_forward.1} parent=1 // pred_check_branch
      %12 = sbr.rel (0) target = $region9
    $region8: #{dst_head_forward.1} parent=1 // pred_region
      %s14 = ssub.s32 6144, 6144
      %15 = vsyncadd [#allocation3], %s14
      %s16 = sshll.u32 [#allocation2], 4
      %s17 = int_to_ptr.vmem [resolvable:$true] %s16
      %22 = dma.hbm_to_vmem [thread:$0]  %s1, 6144, %s17, [#allocation3], 384, 384, 24
    $region9: #{dst_head_forward.1} parent=1 // pred_fallthru
      _
    // Predicated region
    $region10: #{dst_head_forward.1} parent=1 // pred_check
      _
    $region11: #{dst_head_forward.1} parent=1 // pred_check_branch
      %24 = sbr.rel (0) target = $region13
    $region12: #{dst_head_forward.1} parent=1 // pred_region
      _
    $region13: #{dst_head_forward.1} parent=1 // pred_fallthru
      _
    // Predicated region
    $region14: #{dst_head_forward.1} parent=1 // pred_check
      _
    $region15: #{dst_head_forward.1} parent=1 // pred_check_branch
      %26 = sbr.rel (0) target = $region17
    $region16: #{dst_head_forward.1} parent=1 // pred_region
      %27 = dma.done [#allocation3], 6144
    $region17: #{dst_head_forward.1} parent=1 // pred_fallthru
      _
    %v28 = vld [vmem:[%s0] sm:$0xff]
    %v29 = vld [vmem:[#allocation2] sm:$0xff]
    %v30 = vld [vmem:[#allocation2 + $0x8] sm:$0xff]
    %v31 = vld [vmem:[#allocation2 + $0x10] sm:$0xff]
    %v32 = vld [vmem:[#allocation2 + $0x18] sm:$0xff]
    %v33 = vld [vmem:[#allocation2 + $0x20] sm:$0xff]
    %v34 = vld [vmem:[#allocation2 + $0x28] sm:$0xff]
    %v35 = vld [vmem:[#allocation2 + $0x30] sm:$0xff]
    %v36 = vld [vmem:[#allocation2 + $0x38] sm:$0xff]
    %v37 = vld [vmem:[#allocation2 + $0x40] sm:$0xff]
    %v38 = vld [vmem:[#allocation2 + $0x48] sm:$0xff]
    %v39 = vld [vmem:[#allocation2 + $0x50] sm:$0xff]
    %v40 = vld [vmem:[#allocation2 + $0x58] sm:$0xff]
    %v41 = vld [vmem:[#allocation2 + $0x60] sm:$0xff]
    %v42 = vld [vmem:[#allocation2 + $0x68] sm:$0xff]
    %v43 = vld [vmem:[#allocation2 + $0x70] sm:$0xff]
    %v44 = vld [vmem:[#allocation2 + $0x78] sm:$0xff]
    %v45 = vld [vmem:[#allocation2 + $0x80] sm:$0xff]
    %v46 = vld [vmem:[#allocation2 + $0x88] sm:$0xff]
    %v47 = vld [vmem:[#allocation2 + $0x90] sm:$0xff]
    %v48 = vld [vmem:[#allocation2 + $0x98] sm:$0xff]
    %v49 = vld [vmem:[#allocation2 + $0xa0] sm:$0xff]
    %v50 = vld [vmem:[#allocation2 + $0xa8] sm:$0xff]
    %v51 = vld [vmem:[#allocation2 + $0xb0] sm:$0xff]
    %v52 = vld [vmem:[#allocation2 + $0xb8] sm:$0xff]
    %v53 = vld [vmem:[#allocation2 + $0xc0] sm:$0xff]
    %v54 = vld [vmem:[#allocation2 + $0xc8] sm:$0xff]
    %v55 = vld [vmem:[#allocation2 + $0xd0] sm:$0xff]
    %v56 = vld [vmem:[#allocation2 + $0xd8] sm:$0xff]
    %v57 = vld [vmem:[#allocation2 + $0xe0] sm:$0xff]
    %v58 = vld [vmem:[#allocation2 + $0xe8] sm:$0xff]
    %v59 = vld [vmem:[#allocation2 + $0xf0] sm:$0xff]
    %v60 = vld [vmem:[#allocation2 + $0xf8] sm:$0xff]
    %v61 = vld [vmem:[#allocation2 + $0x100] sm:$0xff]
    %v62 = vld [vmem:[#allocation2 + $0x108] sm:$0xff]
    %v63 = vld [vmem:[#allocation2 + $0x110] sm:$0xff]
    %v64 = vld [vmem:[#allocation2 + $0x118] sm:$0xff]
    %v65 = vld [vmem:[#allocation2 + $0x120] sm:$0xff]
    %v66 = vld [vmem:[#allocation2 + $0x128] sm:$0xff]
    %v67 = vld [vmem:[#allocation2 + $0x130] sm:$0xff]
    %v68 = vld [vmem:[#allocation2 + $0x138] sm:$0xff]
    %v69 = vld [vmem:[#allocation2 + $0x140] sm:$0xff]
    %v70 = vld [vmem:[#allocation2 + $0x148] sm:$0xff]
    %v71 = vld [vmem:[#allocation2 + $0x150] sm:$0xff]
    %v72 = vld [vmem:[#allocation2 + $0x158] sm:$0xff]
    %v73 = vld [vmem:[#allocation2 + $0x160] sm:$0xff]
    %v74 = vld [vmem:[#allocation2 + $0x168] sm:$0xff]
    %v75 = vld [vmem:[#allocation2 + $0x170] sm:$0xff]
    %v76 = vld [vmem:[#allocation2 + $0x178] sm:$0xff]
    %v77 = vld [vmem:[%s2] sm:$0x7]
    %v79 = vlaneseq
    %v80 = vshrl.u32 %v79, 7
    %v81 = vsub.s32 0, %v80
    %v82 = vrot.slane %v77, %v81
    %v83 = vlaneseq
    %v84 = vshrl.u32 %v83, 7
    %v85 = vsub.s32 1, %v84
    %v86 = vrot.slane %v77, %v85
    %v87 = vlaneseq
    %v88 = vshrl.u32 %v87, 7
    %v89 = vsub.s32 2, %v88
    %v90 = vrot.slane %v77, %v89
    %94 = vmatprep.subr.mxu0 %v30
    %95 = vmatpush1.msra.mxu0 %v29
    %96 = vmatprep.subr.mxu0 %v33
    %97 = vmatpush1.msra.mxu0 %v32
    %98 = vmatprep.subr.mxu0 %v36
    %99 = vmatpush1.msra.mxu0 %v35
    %100 = vmatprep.subr.mxu0 %v39
    %101 = vmatpush1.msra.mxu0 %v38
    %102 = vmatprep.subr.mxu0 %v42
    %103 = vmatpush1.msra.mxu0 %v41
    %104 = vmatprep.subr.mxu0 %v45
    %105 = vmatpush1.msra.mxu0 %v44
    %106 = vmatprep.subr.mxu0 %v48
    %107 = vmatpush1.msra.mxu0 %v47
    %108 = vmatprep.subr.mxu0 %v51
    %109 = vmatpush1.msra.mxu0 %v50
    %110 = vmatprep.subr.mxu0 %v54
    %111 = vmatpush1.msra.mxu0 %v53
    %112 = vmatprep.subr.mxu0 %v57
    %113 = vmatpush1.msra.mxu0 %v56
    %114 = vmatprep.subr.mxu0 %v60
    %115 = vmatpush1.msra.mxu0 %v59
    %116 = vmatprep.subr.mxu0 %v63
    %117 = vmatpush1.msra.mxu0 %v62
    %118 = vmatprep.subr.mxu0 %v66
    %119 = vmatpush1.msra.mxu0 %v65
    %120 = vmatprep.subr.mxu0 %v69
    %121 = vmatpush1.msra.mxu0 %v68
    %122 = vmatprep.subr.mxu0 %v72
    %123 = vmatpush1.msra.mxu0 %v71
    %124 = vmatprep.subr.mxu0 %v75
    %125 = vmatpush1.msra.mxu0 %v74
    %126 = vmatprep.subr.mxu0 0.0
    %127 = vmatpush1.msra.mxu0 0.0
    %128 = vmatprep.subr.mxu0 0.0
    %129 = vmatpush1.msra.mxu0 0.0
    %130 = vmatprep.subr.mxu0 0.0
    %131 = vmatpush1.msra.mxu0 0.0
    %132 = vmatprep.subr.mxu0 0.0
    %133 = vmatpush1.msra.mxu0 0.0
    %134 = vmatprep.subr.mxu0 0.0
    %135 = vmatpush1.msra.mxu0 0.0
    %136 = vmatprep.subr.mxu0 0.0
    %137 = vmatpush1.msra.mxu0 0.0
    %138 = vmatprep.subr.mxu0 0.0
    %139 = vmatpush1.msra.mxu0 0.0
    %140 = vmatprep.subr.mxu0 0.0
    %141 = vmatpush1.msra.mxu0 0.0
    %142 = vmatprep.subr.mxu0 0.0
    %143 = vmatpush1.msra.mxu0 0.0
    %144 = vmatprep.subr.mxu0 0.0
    %145 = vmatpush1.msra.mxu0 0.0
    %146 = vmatprep.subr.mxu0 0.0
    %147 = vmatpush1.msra.mxu0 0.0
    %148 = vmatprep.subr.mxu0 0.0
    %149 = vmatpush1.msra.mxu0 0.0
    %150 = vmatprep.subr.mxu0 0.0
    %151 = vmatpush1.msra.mxu0 0.0
    %152 = vmatprep.subr.mxu0 0.0
    %153 = vmatpush1.msra.mxu0 0.0
    %154 = vmatprep.subr.mxu0 0.0
    %155 = vmatpush1.msra.mxu0 0.0
    %156 = vmatprep.subr.mxu0 0.0
    %157 = vmatpush1.msra.mxu0 0.0
    %158 = vmatprep.mubr.f32.mxu0 0.0
    %159 = vmatmul.mubr.f32.gmra.mrb[0].mxu0 %v28
    %v160 = vpop.f32.mrb[0].mxu0
    %v161 = vadd.f32 %v82, %v160
    %v162 = vpop.f32.mrb[0].mxu0
    %v163 = vadd.f32 %v86, %v162
    %164 = vdwg.mxu0
    %165 = vmatprep.subr.mxu0 0.0
    %166 = vmatpush1.msra.mxu0 %v31
    %167 = vmatprep.subr.mxu0 0.0
    %168 = vmatpush1.msra.mxu0 %v34
    %169 = vmatprep.subr.mxu0 0.0
    %170 = vmatpush1.msra.mxu0 %v37
    %171 = vmatprep.subr.mxu0 0.0
    %172 = vmatpush1.msra.mxu0 %v40
    %173 = vmatprep.subr.mxu0 0.0
    %174 = vmatpush1.msra.mxu0 %v43
    %175 = vmatprep.subr.mxu0 0.0
    %176 = vmatpush1.msra.mxu0 %v46
    %177 = vmatprep.subr.mxu0 0.0
    %178 = vmatpush1.msra.mxu0 %v49
    %179 = vmatprep.subr.mxu0 0.0
    %180 = vmatpush1.msra.mxu0 %v52
    %181 = vmatprep.subr.mxu0 0.0
    %182 = vmatpush1.msra.mxu0 %v55
    %183 = vmatprep.subr.mxu0 0.0
    %184 = vmatpush1.msra.mxu0 %v58
    %185 = vmatprep.subr.mxu0 0.0
    %186 = vmatpush1.msra.mxu0 %v61
    %187 = vmatprep.subr.mxu0 0.0
    %188 = vmatpush1.msra.mxu0 %v64
    %189 = vmatprep.subr.mxu0 0.0
    %190 = vmatpush1.msra.mxu0 %v67
    %191 = vmatprep.subr.mxu0 0.0
    %192 = vmatpush1.msra.mxu0 %v70
    %193 = vmatprep.subr.mxu0 0.0
    %194 = vmatpush1.msra.mxu0 %v73
    %195 = vmatprep.subr.mxu0 0.0
    %196 = vmatpush1.msra.mxu0 %v76
    %197 = vmatprep.subr.mxu0 0.0
    %198 = vmatpush1.msra.mxu0 0.0
    %199 = vmatprep.subr.mxu0 0.0
    %200 = vmatpush1.msra.mxu0 0.0
    %201 = vmatprep.subr.mxu0 0.0
    %202 = vmatpush1.msra.mxu0 0.0
    %203 = vmatprep.subr.mxu0 0.0
    %204 = vmatpush1.msra.mxu0 0.0
    %205 = vmatprep.subr.mxu0 0.0
    %206 = vmatpush1.msra.mxu0 0.0
    %207 = vmatprep.subr.mxu0 0.0
    %208 = vmatpush1.msra.mxu0 0.0
    %209 = vmatprep.subr.mxu0 0.0
    %210 = vmatpush1.msra.mxu0 0.0
    %211 = vmatprep.subr.mxu0 0.0
    %212 = vmatpush1.msra.mxu0 0.0
    %213 = vmatprep.subr.mxu0 0.0
    %214 = vmatpush1.msra.mxu0 0.0
    %215 = vmatprep.subr.mxu0 0.0
    %216 = vmatpush1.msra.mxu0 0.0
    %217 = vmatprep.subr.mxu0 0.0
    %218 = vmatpush1.msra.mxu0 0.0
    %219 = vmatprep.subr.mxu0 0.0
    %220 = vmatpush1.msra.mxu0 0.0
    %221 = vmatprep.subr.mxu0 0.0
    %222 = vmatpush1.msra.mxu0 0.0
    %223 = vmatprep.subr.mxu0 0.0
    %224 = vmatpush1.msra.mxu0 0.0
    %225 = vmatprep.subr.mxu0 0.0
    %226 = vmatpush1.msra.mxu0 0.0
    %227 = vmatprep.subr.mxu0 0.0
    %228 = vmatpush1.msra.mxu0 0.0
    %229 = vmatprep.mubr.f32.mxu0 0.0
    %230 = vmatmul.mubr.f32.gmra.mrb[0].mxu0 %v28
    %v231 = vpop.f32.mrb[0].mxu0
    %v232 = vadd.f32 %v90, %v231
    %v233 = vpop.f32.mrb[0].mxu0
    %234 = vdwg.mxu0
    %235 = vst [vmem:[%s3] sm:$0xff] %v161
    %236 = vst [vmem:[%s3 + $0x8] sm:$0xff] %v163
    %237 = vst [vmem:[%s3 + $0x10] sm:$0xff] %v232
    // Predicated region
    $region18: #{dst_head_forward.1} parent=1 // pred_check
      _
    $region19: #{dst_head_forward.1} parent=1 // pred_check_branch
      %239 = sbr.rel (0) target = $region21
    $region20: #{dst_head_forward.1} parent=1 // pred_region
      _
    $region21: #{dst_head_forward.1} parent=1 // pred_fallthru
      _
    // Predicated region
    $region22: #{dst_head_forward.1} parent=1 // pred_check
      _
    $region23: #{dst_head_forward.1} parent=1 // pred_check_branch
      %241 = sbr.rel (0) target = $region25
    $region24: #{dst_head_forward.1} parent=1 // pred_region
      _
    $region25: #{dst_head_forward.1} parent=1 // pred_fallthru
      _
    %242 = vsyncpa [#allocation3], 1

</llo_original>
